<compile_context>
chip_gen: v6e
topology: v6e:2x2x1
jax: 0.10.0
libtpu: 0.0.40
codegen_flags: <defaults>
</compile_context>

<pallas_src>
import functools

import jax
import jax.numpy as jnp
from jax.experimental import pallas as pl
from jax.experimental.pallas import tpu as pltpu


# --------------------------- chip-aware budgets ----------------------------- #

def _tpu_budgets():
    """Return (tile_budget_bytes, vmem_limit_bytes, num_tensorcores)."""
    vmem_cap = None
    num_cores = 1
    try:
        info = pltpu.get_tpu_info()
        cap = int(getattr(info, "vmem_capacity_bytes", 0) or 0)
        vmem_cap = cap if cap > 0 else None
        for attr in ("num_cores", "tensorcore_count", "num_tensorcores",
                     "core_count"):
            v = getattr(info, attr, None)
            if v:
                num_cores = int(v)
                break
    except Exception:
        pass
    if vmem_cap is None:
        # Conservative fallback: assume the smallest per-TC VMEM (v7x, 64 MiB).
        vmem_cap = 64 * 1024 * 1024
    if vmem_cap >= 100 * 1024 * 1024:      # v5e / v6e: 128 MiB VMEM
        tile_budget = 64 * 1024 * 1024
        vmem_limit = 96 * 1024 * 1024
    else:                                   # v7x: 64 MiB per TensorCore
        tile_budget = 20 * 1024 * 1024
        vmem_limit = 40 * 1024 * 1024
    return tile_budget, vmem_limit, num_cores


# --------------------------------- kernels ---------------------------------- #

def _rmsnorm_kernel(x_ref, w_ref, o_ref, *, eps, inv_h):
    # x_ref: (TM, H) row tile; w_ref: (1, H) weight row.
    x = x_ref[...].astype(jnp.float32)
    var = jnp.sum(x * x, axis=-1, keepdims=True) * inv_h
    y = x * jax.lax.rsqrt(var + eps)
    # Match torch: weight * hidden_states.to(input_dtype)
    o_ref[...] = (w_ref[...] * y.astype(x_ref.dtype)).astype(o_ref.dtype)


def _fused_add_rmsnorm_kernel(x_ref, r_ref, w_ref, o_ref, res_ref, *, eps, inv_h):
    # Fused residual add: hs = x + residual (in f32); residual out = hs cast back.
    hs = x_ref[...].astype(jnp.float32) + r_ref[...].astype(jnp.float32)
    res_ref[...] = hs.astype(res_ref.dtype)
    var = jnp.sum(hs * hs, axis=-1, keepdims=True) * inv_h
    y = hs * jax.lax.rsqrt(var + eps)
    o_ref[...] = (w_ref[...] * y.astype(x_ref.dtype)).astype(o_ref.dtype)


# ------------------------------ tile selection ------------------------------ #

def _choose_tm(n, h, itemsize, fused, tile_budget, num_cores):
    """Row-tile size: as big as the VMEM budget allows, aligned per dtype."""
    row_align = {4: 8, 2: 16, 1: 32}.get(itemsize, 8)
    # Double-buffered input/output tiles (x[,r] + out[,res]) plus f32 temps
    # that Mosaic materializes per element (h_f32/y_f32, more on fused path).
    n_bufs = 8 if fused else 4
    n_f32_temps = 4 if fused else 2
    per_row = h * (n_bufs * itemsize + n_f32_temps * 4)
    tm = max(1, tile_budget // per_row)
    if num_cores > 1:
        # Keep >= num_cores grid steps so CORE_PARALLEL can shard across TCs.
        tm = min(tm, pl.cdiv(n, num_cores))
    tm = max(row_align, (tm // row_align) * row_align)
    if tm >= n:
        return n  # single block over the full token extent (legal block dim)
    return tm


# --------------------------------- wrapper ----------------------------------- #

class RMSNorm:
    """Pallas-TPU RMSNorm matching the PyTorch module's forward semantics."""

    def __init__(self, *, hidden_size: int, eps: float, dtype=jnp.float32,
                 has_weights: bool = True):
        # Deterministic init: torch.ones(hidden_size) (same whether param or buffer).
        self.hidden_size = hidden_size
        self.variance_epsilon = float(eps)
        self.weight = jnp.ones((hidden_size,), dtype=dtype)
        del has_weights  # weight values identical either way

    def _run(self, x2d, r2d):
        n, h = x2d.shape
        fused = r2d is not None

        tile_budget, vmem_limit, num_cores = _tpu_budgets()
        itemsize = jnp.dtype(x2d.dtype).itemsize
        tm = _choose_tm(n, h, itemsize, fused, tile_budget, num_cores)
        grid = (pl.cdiv(n, tm),)  # partial last block handled by Pallas masking

        # Torch promotion semantics: result dtype of weight * hidden.to(input_dtype).
        out_dtype = jnp.promote_types(self.weight.dtype, x2d.dtype)
        w2d = self.weight.reshape(1, h)

        row_spec = pl.BlockSpec((tm, h), lambda i: (i, 0))
        w_spec = pl.BlockSpec((1, h), lambda i: (0, 0))

        if num_cores > 1 and grid[0] >= 2:
            sems = (getattr(pltpu, "CORE_PARALLEL", "parallel"),)
        else:
            sems = ("parallel",)
        cparams = pltpu.CompilerParams(
            dimension_semantics=sems,
            vmem_limit_bytes=vmem_limit,
        )
        inv_h = 1.0 / float(h)

        if not fused:
            kernel = functools.partial(
                _rmsnorm_kernel, eps=self.variance_epsilon, inv_h=inv_h)
            out = pl.pallas_call(
                kernel,
                out_shape=jax.ShapeDtypeStruct((n, h), out_dtype),
                grid_spec=pltpu.PrefetchScalarGridSpec(
                    num_scalar_prefetch=0,
                    grid=grid,
                    in_specs=[row_spec, w_spec],
                    out_specs=row_spec,
                ),
                compiler_params=cparams,
            )(x2d, w2d)
            return out, None

        kernel = functools.partial(
            _fused_add_rmsnorm_kernel, eps=self.variance_epsilon, inv_h=inv_h)
        out, res = pl.pallas_call(
            kernel,
            out_shape=(jax.ShapeDtypeStruct((n, h), out_dtype),
                       jax.ShapeDtypeStruct((n, h), x2d.dtype)),
            grid_spec=pltpu.PrefetchScalarGridSpec(
                num_scalar_prefetch=0,
                grid=grid,
                in_specs=[row_spec, row_spec, w_spec],
                out_specs=(row_spec, row_spec),
            ),
            compiler_params=cparams,
        )(x2d, r2d, w2d)
        return out, res

    def __call__(self, hidden_states, residual=...):
        orig_shape = hidden_states.shape
        h = self.hidden_size
        assert orig_shape[-1] == h
        n = 1
        for d in orig_shape[:-1]:
            n *= d
        x2d = hidden_states.reshape(n, h)

        if isinstance(residual, jnp.ndarray):
            r2d = residual.reshape(n, h)
            out2d, res2d = self._run(x2d, r2d)
            return out2d.reshape(orig_shape), res2d.reshape(orig_shape)
        else:
            out2d, _ = self._run(x2d, None)
            out = out2d.reshape(orig_shape)
            if residual is ...:
                return out
            else:  # residual is None
                return out, residual

    def skip_forward(self, hidden_states, residual=...):
        if residual is ...:
            return hidden_states
        return hidden_states, residual


# -------------------------------- reference ---------------------------------- #

def _ref_rmsnorm(x, w, eps, residual=None):
    input_dtype = x.dtype
    xf = x.astype(jnp.float32)
    res_out = None
    if residual is not None:
        xf = xf + residual.astype(jnp.float32)
        res_out = xf.astype(input_dtype)
    var = jnp.mean(xf * xf, axis=-1, keepdims=True)
    y = xf * jax.lax.rsqrt(var + eps)
    out = (w * y.astype(input_dtype))
    return out, res_out


# ----------------------------------- main ------------------------------------ #

if __name__ == "__main__":
    key = jax.random.PRNGKey(0)
    batch, seq, hidden = 2, 8, 32
    eps = 1e-6

    k1, k2, k3 = jax.random.split(key, 3)
    x = jax.random.normal(k1, (batch, seq, hidden), dtype=jnp.float32)
    res_in = jax.random.normal(k2, (batch, seq, hidden), dtype=jnp.float32)

    norm = RMSNorm(hidden_size=hidden, eps=eps, dtype=jnp.float32)

    # Case 1: no residual (residual is ...): returns just hidden_states.
    out1 = jax.block_until_ready(norm(x))
    ref1, _ = _ref_rmsnorm(x, norm.weight, eps)
    assert jnp.allclose(out1, ref1, atol=1e-5, rtol=1e-5), "rmsnorm mismatch"

    # Case 2: fused residual add: returns (hidden_states, residual).
    out2, res2 = norm(x, res_in)
    out2 = jax.block_until_ready(out2)
    res2 = jax.block_until_ready(res2)
    ref2, refres2 = _ref_rmsnorm(x, norm.weight, eps, residual=res_in)
    assert jnp.allclose(out2, ref2, atol=1e-5, rtol=1e-5), "fused rmsnorm mismatch"
    assert jnp.allclose(res2, refres2, atol=1e-5, rtol=1e-5), "residual mismatch"

    # Case 3: ragged token count (exercises the cdiv grid / full-extent block).
    x3 = jax.random.normal(k3, (20, hidden), dtype=jnp.float32)
    out3 = jax.block_until_ready(norm(x3))
    ref3, _ = _ref_rmsnorm(x3, norm.weight, eps)
    assert jnp.allclose(out3, ref3, atol=1e-5, rtol=1e-5), "ragged rmsnorm mismatch"

    # Case 4: explicit residual=None returns (hidden_states, None) like torch.
    out4, res4 = norm(x, None)
    out4 = jax.block_until_ready(out4)
    assert res4 is None
    assert jnp.allclose(out4, ref1, atol=1e-5, rtol=1e-5), "residual=None mismatch"

    print("KERNEL_OK")
</pallas_src>

<mosaic_0001>
module attributes {stable_mosaic.version = 11 : i64} {
  func.func @_rmsnorm_kernel(%arg0: i32, %arg1: memref<16x32xf32, #tpu.memory_space<vmem>>, %arg2: memref<1x32xf32, #tpu.memory_space<vmem>>, %arg3: memref<16x32xf32, #tpu.memory_space<vmem>>) attributes {dimension_semantics = [#tpu.dimension_semantics<parallel>], iteration_bounds = array<i64: 1>, scalar_prefetch = 0 : i64, scratch_operands = 0 : i64, tpu.core_type = #tpu.core_type<tc>, window_params = [{transform_indices = @transform_0, window_bounds = array<i64: 16, 32>}, {pipeline_mode = #tpu.pipeline_mode<synchronous>, transform_indices = @transform_1, window_bounds = array<i64: 1, 32>}, {transform_indices = @transform_2, window_bounds = array<i64: 16, 32>}]} {
    %c0 = arith.constant 0 : index
    %c0_0 = arith.constant 0 : index
    %0 = vector.load %arg1[%c0, %c0_0] : memref<16x32xf32, #tpu.memory_space<vmem>>, vector<16x32xf32>
    %1 = arith.mulf %0, %0 : vector<16x32xf32>
    %cst = arith.constant dense<0.000000e+00> : vector<16xf32>
    %2 = vector.multi_reduction <add>, %1, %cst [1] : vector<16x32xf32> to vector<16xf32>
    %3 = vector.shape_cast %2 : vector<16xf32> to vector<16x1xf32>
    %cst_1 = arith.constant 3.125000e-02 : f32
    %4 = vector.broadcast %cst_1 : f32 to vector<16x1xf32>
    %5 = arith.mulf %3, %4 : vector<16x1xf32>
    %cst_2 = arith.constant 9.99999997E-7 : f32
    %6 = vector.broadcast %cst_2 : f32 to vector<16x1xf32>
    %7 = arith.addf %5, %6 : vector<16x1xf32>
    %8 = math.rsqrt %7 : vector<16x1xf32>
    %9 = vector.broadcast %8 : vector<16x1xf32> to vector<16x32xf32>
    %10 = arith.mulf %0, %9 : vector<16x32xf32>
    %c0_3 = arith.constant 0 : index
    %c0_4 = arith.constant 0 : index
    %11 = vector.load %arg2[%c0_3, %c0_4] : memref<1x32xf32, #tpu.memory_space<vmem>>, vector<1x32xf32>
    %12 = vector.broadcast %11 : vector<1x32xf32> to vector<16x32xf32>
    %13 = arith.mulf %12, %10 : vector<16x32xf32>
    %c0_5 = arith.constant 0 : index
    %c0_6 = arith.constant 0 : index
    %14 = vector.load %arg3[%c0_5, %c0_6] : memref<16x32xf32, #tpu.memory_space<vmem>>, vector<16x32xf32>
    tpu.vector_store %arg3[%c0_5, %c0_6], %13 {strides = array<i32>} : memref<16x32xf32, #tpu.memory_space<vmem>>, vector<16x32xf32>,
    return
  }
  func.func @transform_0(%arg0: i32) -> (i32, i32) {
    %c0_i32 = arith.constant 0 : i32
    %c0_i32_0 = arith.constant 0 : i32
    return %arg0, %c0_i32 : i32, i32
  }
  func.func @transform_1(%arg0: i32) -> (i32, i32) {
    %c0_i32 = arith.constant 0 : i32
    %c0_i32_0 = arith.constant 0 : i32
    %c0_i32_1 = arith.constant 0 : i32
    return %c0_i32, %c0_i32_0 : i32, i32
  }
  func.func @transform_2(%arg0: i32) -> (i32, i32) {
    %c0_i32 = arith.constant 0 : i32
    %c0_i32_0 = arith.constant 0 : i32
    return %arg0, %c0_i32 : i32, i32
  }
}

</mosaic_0001>

<llo_original>
// kernel: tpu_custom_call.1
$region0: #{tpu_custom_call.1}
  #allocation0 [shape = 'u32[]', space=smem, size = 0x4, offset = 0x4, fixed_abs, tag = 'smem constant byte address 0x4 - core index']
  #allocation1 [shape = 'u32[144,128]{1,0:T(1,128)}', space=vmem, size = 0x12000, scoped, tag = 'internal scratch']
  %s0 = inlined_call_operand.hbm [shape: f32[16,32], index: 0, kind: input, shape index: {}]
  %s1 = inlined_call_operand.vmem [shape: f32[1,32], index: 1, kind: input, shape index: {}]
  %s2 = inlined_call_operand.hbm [shape: f32[16,32], index: 2, kind: output, shape index: {}]
  %s3 = sld [smem:[#allocation0]]
  $region22: #{tpu_custom_call.1} parent=0
    _
  %s5 = ssub.s32 1, %s3
  %s6 = scalar_select 0, %s5, %s3
  $region1: #{tpu_custom_call.1} parent=0
    #allocation2 [shape = 'u8[8192]{0}', space=vmem, size = 0x2000, scoped, tag = 'input window, operand 0, single buffered']
    #allocation3 [shape = 's32[1]{0}', space=sflag, size = 0x4, scoped, tag = 'scoped memory for tpu_custom_call.1']
    #allocation4 [shape = 's32[1]{0}', space=sflag, size = 0x4, scoped, tag = 'scoped memory for tpu_custom_call.1']
    #allocation5 [shape = 'u8[8192]{0}', space=vmem, size = 0x2000, scoped, tag = 'output window, operand 0, single buffered']
    %7 = vsyncpa [#allocation3], 0
    %8 = vsyncpa [#allocation4], 0
    // Predicated region
    $region2: #{tpu_custom_call.1} parent=1 // pred_check
      _
    $region3: #{tpu_custom_call.1} parent=1 // pred_check_branch
      %10 = sbr.rel (0) target = $region5
    $region4: #{tpu_custom_call.1} parent=1 // pred_region
      %s12 = ssub.s32 256, 256
      %13 = vsyncadd [#allocation3], %s12
      %s14 = sshll.u32 [#allocation2], 4
      %s15 = int_to_ptr.vmem [resolvable:$true] %s14
      %20 = dma.hbm_to_vmem [thread:$0]  %s0, 256, %s15, [#allocation3], 128, 128, 8
    $region5: #{tpu_custom_call.1} parent=1 // pred_fallthru
      _
    // Predicated region
    $region6: #{tpu_custom_call.1} parent=1 // pred_check
      _
    $region7: #{tpu_custom_call.1} parent=1 // pred_check_branch
      %22 = sbr.rel (0) target = $region9
    $region8: #{tpu_custom_call.1} parent=1 // pred_region
      _
    $region9: #{tpu_custom_call.1} parent=1 // pred_fallthru
      _
    // Predicated region
    $region10: #{tpu_custom_call.1} parent=1 // pred_check
      _
    $region11: #{tpu_custom_call.1} parent=1 // pred_check_branch
      %24 = sbr.rel (0) target = $region13
    $region12: #{tpu_custom_call.1} parent=1 // pred_region
      %25 = dma.done [#allocation3], 256
    $region13: #{tpu_custom_call.1} parent=1 // pred_fallthru
      _
    %v26 = vld [vmem:[#allocation2] sm:$0xff]
    %v27 = vld [vmem:[#allocation2 + $0x8] sm:$0xff]
    %v28 = vmul.f32 %v26, %v26
    %v29 = vmul.f32 %v27, %v27
    %vm30 = vcmask 261120
    %v31 = vsel %vm30, %v28, 0.0
    %32 = vadd.xlane.f32.xlu0 %v31
    %v33 = vpop.xlane.xlu0 %32
    %v34 = vsel %vm30, %v29, 0.0
    %35 = vadd.xlane.f32.xlu0 %v34
    %v36 = vpop.xlane.xlu0 %35
    %v37 = vmul.f32 %v33, 0.03125
    %v38 = vmul.f32 %v36, 0.03125
    %v39 = vadd.f32 %v37, 1e-06
    %v40 = vadd.f32 %v38, 1e-06
    %v41 = vrsqrt.pop %v39
    %v42 = vrsqrt.pop %v40
    %v43 = vmul.f32 %v26, %v41
    %v44 = vmul.f32 %v27, %v42
    %v45 = vld [vmem:[%s1] sm:$0x1]
    %v47 = vlaneseq
    %v48 = vshrl.u32 %v47, 7
    %v49 = vsub.s32 0, %v48
    %v50 = vrot.slane %v45, %v49
    %v52 = vmul.f32 %v50, %v43
    %v53 = vmul.f32 %v50, %v44
    %54 = vst.msk [vmem:[#allocation5] sm:$0xff] %vm30, %v52
    %55 = vst.msk [vmem:[#allocation5 + $0x8] sm:$0xff] %vm30, %v53
    // Predicated region
    $region14: #{tpu_custom_call.1} parent=1 // pred_check
      _
    $region15: #{tpu_custom_call.1} parent=1 // pred_check_branch
      %57 = sbr.rel (0) target = $region17
    $region16: #{tpu_custom_call.1} parent=1 // pred_region
      %s59 = ssub.s32 256, 256
      %60 = vsyncadd [#allocation4], %s59
      %s61 = sshll.u32 [#allocation5], 4
      %s62 = int_to_ptr.vmem [resolvable:$true] %s61
      %67 = dma.vmem_to_hbm [thread:$0]  %s62, 256, %s2, [#allocation4], 128, 128, 8
    $region17: #{tpu_custom_call.1} parent=1 // pred_fallthru
      _
    // Predicated region
    $region18: #{tpu_custom_call.1} parent=1 // pred_check
      _
    $region19: #{tpu_custom_call.1} parent=1 // pred_check_branch
      %69 = sbr.rel (0) target = $region21
    $region20: #{tpu_custom_call.1} parent=1 // pred_region
      %70 = dma.done [#allocation4], 256
    $region21: #{tpu_custom_call.1} parent=1 // pred_fallthru
      _
    %71 = vsyncpa [#allocation3], 1
    %72 = vsyncpa [#allocation4], 1

</llo_original>
